<compile_context>
chip_gen: v7x
topology: tpu7x:2x2x1
jax: 0.10.0
libtpu: 0.0.40
codegen_flags: <defaults>
</compile_context>

<pallas_src>
import jax
import jax.numpy as jnp
from jax.experimental import pallas as pl
from jax.experimental.pallas import tpu as pltpu


def _round_up(n, m):
    return ((n + m - 1) // m) * m


def _make_conv_bn_relu_kernel(KH, KW, Wp, L_seg, Cout_pad):
    """Build the per-batch-element kernel (static shape params captured)."""

    def kernel(x_ref, w_ref, b_ref, o_ref):
        # x_ref: (1, Cin, L_ext)      bf16, zero-extended flattened padded image
        # w_ref: (KH*KW, Cout_pad, Cin) bf16, BN-folded per-tap weights (resident)
        # b_ref: (Cout_pad, 1)        f32, BN-folded bias (resident)
        # o_ref: (1, Cout_pad, L_seg) f32, lane-dense output (L_seg % 128 == 0)
        x = x_ref[0]                                               # (Cin, L_ext)
        # bias folded into the accumulator init (f32 epilogue)
        acc = jnp.broadcast_to(b_ref[...], (Cout_pad, L_seg)).astype(jnp.float32)
        # in-kernel im2col: 9 statically shifted lane views, 9 accumulating MXU dots
        for kh in range(KH):
            for kw in range(KW):
                t = kh * KW + kw
                start = kh * Wp + kw                               # static offset
                view = x[:, start:start + L_seg]                   # (Cin, L_seg) bf16
                acc = acc + jnp.dot(w_ref[t], view,
                                    preferred_element_type=jnp.float32)
        o_ref[0] = jnp.maximum(acc, 0.0).astype(o_ref.dtype)      # ReLU, full-lane store

    return kernel


def conv2d_block_forward(x, w, gamma, beta, running_mean, running_var, *, eps=1e-5):
    """ReLU(BatchNorm2d(Conv2d(x, w, padding='same', stride=1, bias=False))).

    x: (B, Cin, H, W)       NCHW, as in PyTorch
    w: (Cout, Cin, KH, KW)  torch Conv2d weight layout
    BatchNorm uses inference (running-stats) semantics, folded into the conv.
    (PyTorch only allows padding='same' with stride=1, which is what this does.)
    """
    B, C_in, H, W = x.shape
    C_out, c_in_w, KH, KW = w.shape
    assert c_in_w == C_in

    # ---- fold BatchNorm (eval semantics) into conv weight + bias, in f32,
    #      BEFORE any bf16 cast (keeps the fold exact).
    scale = (gamma / jnp.sqrt(running_var + eps)).astype(jnp.float32)   # (Cout,)
    w_eff = w.astype(jnp.float32) * scale[:, None, None, None]          # (Cout,Cin,KH,KW)
    b_eff = (beta - running_mean * scale).astype(jnp.float32)           # (Cout,)

    # ---- 'same' padding geometry (stride 1)
    ph_lo, ph_hi = (KH - 1) // 2, (KH - 1) - (KH - 1) // 2
    pw_lo, pw_hi = (KW - 1) // 2, (KW - 1) - (KW - 1) // 2
    Hp, Wp = H + ph_lo + ph_hi, W + pw_lo + pw_hi
    P = Hp * Wp                                   # padded-grid flat length
    L_seg = _round_up(P, 128)                     # lane-dense output width (>=128 multiple)
    lead = ph_lo * Wp + pw_lo                     # left margin so all tap shifts are >= 0
    L_ext = (KH - 1) * Wp + (KW - 1) + L_seg      # enough room for every shifted view
    Cout_pad = _round_up(C_out, 8)

    # ---- extended, zero-padded, flattened input (the only per-pixel HBM stream),
    #      cast to bf16 for the MXU.  Bytes ~= input bytes (no 9x im2col in HBM).
    x_pad = jnp.pad(x, ((0, 0), (0, 0), (ph_lo, ph_hi), (pw_lo, pw_hi)))
    x_flat = x_pad.reshape(B, C_in, P)
    x_ext = jnp.pad(x_flat, ((0, 0), (0, 0), (lead, L_ext - lead - P)))
    x_ext = x_ext.astype(jnp.bfloat16)            # (B, Cin, L_ext)

    # ---- per-tap weights (KH*KW, Cout_pad, Cin) bf16, bias (Cout_pad, 1) f32
    w_taps = jnp.transpose(w_eff, (2, 3, 0, 1)).reshape(KH * KW, C_out, C_in)
    w_taps = jnp.pad(w_taps, ((0, 0), (0, Cout_pad - C_out), (0, 0))).astype(jnp.bfloat16)
    b2 = jnp.pad(b_eff, (0, Cout_pad - C_out)).reshape(Cout_pad, 1)

    kernel = _make_conv_bn_relu_kernel(KH, KW, Wp, L_seg, Cout_pad)

    out_flat = pl.pallas_call(
        kernel,
        out_shape=jax.ShapeDtypeStruct((B, Cout_pad, L_seg), x.dtype),
        grid_spec=pltpu.PrefetchScalarGridSpec(
            num_scalar_prefetch=0,
            grid=(B,),                                              # >=2 steps for v7x
            in_specs=[
                pl.BlockSpec((1, C_in, L_ext), lambda b: (b, 0, 0)),        # per-image
                pl.BlockSpec((KH * KW, Cout_pad, C_in), lambda b: (0, 0, 0)),  # resident
                pl.BlockSpec((Cout_pad, 1), lambda b: (0, 0)),              # resident
            ],
            out_specs=pl.BlockSpec((1, Cout_pad, L_seg), lambda b: (b, 0, 0)),
        ),
        compiler_params=pltpu.CompilerParams(
            dimension_semantics=("parallel",),          # shard batch across v7x TCs
            vmem_limit_bytes=32 * 1024 * 1024,          # explicit; safe on v5e/v6e/v7x
        ),
    )(x_ext, w_taps, b2)

    # ---- wrapper-side extraction of the valid NCHW region (free layout plumbing)
    out = out_flat[:, :C_out, :P].reshape(B, C_out, Hp, Wp)
    return out[:, :, ph_lo:ph_lo + H, pw_lo:pw_lo + W]


def conv2d_block_reference(x, w, gamma, beta, running_mean, running_var, *, eps=1e-5):
    """Pure-JAX reference mirroring the PyTorch forward (eval-mode BatchNorm)."""
    KH, KW = w.shape[2], w.shape[3]
    ph_lo, ph_hi = (KH - 1) // 2, (KH - 1) - (KH - 1) // 2
    pw_lo, pw_hi = (KW - 1) // 2, (KW - 1) - (KW - 1) // 2
    y = jax.lax.conv_general_dilated(
        x, w, window_strides=(1, 1),
        padding=((ph_lo, ph_hi), (pw_lo, pw_hi)),
        dimension_numbers=("NCHW", "OIHW", "NCHW"),
        precision=jax.lax.Precision.HIGHEST)
    inv = 1.0 / jnp.sqrt(running_var + eps)
    y = (y - running_mean[None, :, None, None]) * (gamma * inv)[None, :, None, None] \
        + beta[None, :, None, None]
    return jnp.maximum(y, 0.0)


if __name__ == "__main__":
    # Small shapes consistent with the module: batch=2, in_channels=4,
    # out_channels=8, spatial=16x16, kernel=3.
    B, C_in, C_out, H, W = 2, 4, 8, 16, 16
    k = 3

    key = jax.random.PRNGKey(0)
    kx, kw, kg, kb, km, kv = jax.random.split(key, 6)

    x = jax.random.normal(kx, (B, C_in, H, W), dtype=jnp.float32)
    w = jax.random.normal(kw, (C_out, C_in, k, k), dtype=jnp.float32) * 0.1
    gamma = 1.0 + 0.1 * jax.random.normal(kg, (C_out,), dtype=jnp.float32)
    beta = 0.1 * jax.random.normal(kb, (C_out,), dtype=jnp.float32)
    running_mean = 0.1 * jax.random.normal(km, (C_out,), dtype=jnp.float32)
    running_var = jax.random.uniform(kv, (C_out,), dtype=jnp.float32,
                                     minval=0.5, maxval=1.5)

    out = conv2d_block_forward(x, w, gamma, beta, running_mean, running_var)
    out = jax.block_until_ready(out)

    ref = conv2d_block_reference(x, w, gamma, beta, running_mean, running_var)
    assert out.shape == (B, C_out, H, W)
    # bf16 MXU operands with f32 accumulation -> relaxed tolerance vs f32 reference
    assert jnp.allclose(out, ref, atol=5e-2, rtol=5e-2), "mismatch vs reference"

    print("KERNEL_OK")
</pallas_src>

<mosaic_0001>
module attributes {stable_mosaic.version = 11 : i64} {
  func.func @kernel(%arg0: i32, %arg1: memref<1x4x422xbf16, #tpu.memory_space<vmem>>, %arg2: memref<9x8x4xbf16, #tpu.memory_space<vmem>>, %arg3: memref<8x1xf32, #tpu.memory_space<vmem>>, %arg4: memref<1x8x384xf32, #tpu.memory_space<vmem>>) attributes {dimension_semantics = [#tpu.dimension_semantics<parallel>], iteration_bounds = array<i64: 2>, scalar_prefetch = 0 : i64, scratch_operands = 0 : i64, tpu.core_type = #tpu.core_type<tc>, window_params = [{transform_indices = @transform_0, window_bounds = array<i64: 1, 4, 422>}, {pipeline_mode = #tpu.pipeline_mode<synchronous>, transform_indices = @transform_1, window_bounds = array<i64: 9, 8, 4>}, {pipeline_mode = #tpu.pipeline_mode<synchronous>, transform_indices = @transform_2, window_bounds = array<i64: 8, 1>}, {transform_indices = @transform_3, window_bounds = array<i64: 1, 8, 384>}]} {
    %c0 = arith.constant 0 : index
    %c0_0 = arith.constant 0 : index
    %c0_1 = arith.constant 0 : index
    %0 = vector.load %arg1[%c0, %c0_0, %c0_1] : memref<1x4x422xbf16, #tpu.memory_space<vmem>>, vector<1x4x422xbf16>
    %1 = vector.shape_cast %0 : vector<1x4x422xbf16> to vector<4x422xbf16>
    %c0_2 = arith.constant 0 : index
    %c0_3 = arith.constant 0 : index
    %2 = vector.load %arg3[%c0_2, %c0_3] : memref<8x1xf32, #tpu.memory_space<vmem>>, vector<8x1xf32>
    %3 = vector.shape_cast %2 : vector<8x1xf32> to vector<8x1xf32>
    %4 = vector.broadcast %3 : vector<8x1xf32> to vector<8x384xf32>
    %5 = vector.extract_strided_slice %1 {offsets = [0, 0], sizes = [4, 384], strides = [1, 1]} : vector<4x422xbf16> to vector<4x384xbf16>
    %c0_4 = arith.constant 0 : index
    %c0_5 = arith.constant 0 : index
    %c0_6 = arith.constant 0 : index
    %6 = vector.load %arg2[%c0_4, %c0_5, %c0_6] : memref<9x8x4xbf16, #tpu.memory_space<vmem>>, vector<1x8x4xbf16>
    %7 = vector.shape_cast %6 : vector<1x8x4xbf16> to vector<8x4xbf16>
    %cst = arith.constant dense<0.000000e+00> : vector<8x384xf32>
    %8 = tpu.matmul %7, %5, %cst {dimension_numbers = #tpu.dot_dimension_numbers<[1], [0], [0], [1], [0, 0, 1, 1], [], []>} : vector<8x4xbf16>, vector<4x384xbf16>, vector<8x384xf32> -> vector<8x384xf32>
    %9 = arith.addf %4, %8 : vector<8x384xf32>
    %10 = vector.extract_strided_slice %1 {offsets = [0, 1], sizes = [4, 384], strides = [1, 1]} : vector<4x422xbf16> to vector<4x384xbf16>
    %c1 = arith.constant 1 : index
    %c0_7 = arith.constant 0 : index
    %c0_8 = arith.constant 0 : index
    %11 = vector.load %arg2[%c1, %c0_7, %c0_8] : memref<9x8x4xbf16, #tpu.memory_space<vmem>>, vector<1x8x4xbf16>
    %12 = vector.shape_cast %11 : vector<1x8x4xbf16> to vector<8x4xbf16>
    %cst_9 = arith.constant dense<0.000000e+00> : vector<8x384xf32>
    %13 = tpu.matmul %12, %10, %cst_9 {dimension_numbers = #tpu.dot_dimension_numbers<[1], [0], [0], [1], [0, 0, 1, 1], [], []>} : vector<8x4xbf16>, vector<4x384xbf16>, vector<8x384xf32> -> vector<8x384xf32>
    %14 = arith.addf %9, %13 : vector<8x384xf32>
    %15 = vector.extract_strided_slice %1 {offsets = [0, 2], sizes = [4, 384], strides = [1, 1]} : vector<4x422xbf16> to vector<4x384xbf16>
    %c2 = arith.constant 2 : index
    %c0_10 = arith.constant 0 : index
    %c0_11 = arith.constant 0 : index
    %16 = vector.load %arg2[%c2, %c0_10, %c0_11] : memref<9x8x4xbf16, #tpu.memory_space<vmem>>, vector<1x8x4xbf16>
    %17 = vector.shape_cast %16 : vector<1x8x4xbf16> to vector<8x4xbf16>
    %cst_12 = arith.constant dense<0.000000e+00> : vector<8x384xf32>
    %18 = tpu.matmul %17, %15, %cst_12 {dimension_numbers = #tpu.dot_dimension_numbers<[1], [0], [0], [1], [0, 0, 1, 1], [], []>} : vector<8x4xbf16>, vector<4x384xbf16>, vector<8x384xf32> -> vector<8x384xf32>
    %19 = arith.addf %14, %18 : vector<8x384xf32>
    %20 = vector.extract_strided_slice %1 {offsets = [0, 18], sizes = [4, 384], strides = [1, 1]} : vector<4x422xbf16> to vector<4x384xbf16>
    %c3 = arith.constant 3 : index
    %c0_13 = arith.constant 0 : index
    %c0_14 = arith.constant 0 : index
    %21 = vector.load %arg2[%c3, %c0_13, %c0_14] : memref<9x8x4xbf16, #tpu.memory_space<vmem>>, vector<1x8x4xbf16>
    %22 = vector.shape_cast %21 : vector<1x8x4xbf16> to vector<8x4xbf16>
    %cst_15 = arith.constant dense<0.000000e+00> : vector<8x384xf32>
    %23 = tpu.matmul %22, %20, %cst_15 {dimension_numbers = #tpu.dot_dimension_numbers<[1], [0], [0], [1], [0, 0, 1, 1], [], []>} : vector<8x4xbf16>, vector<4x384xbf16>, vector<8x384xf32> -> vector<8x384xf32>
    %24 = arith.addf %19, %23 : vector<8x384xf32>
    %25 = vector.extract_strided_slice %1 {offsets = [0, 19], sizes = [4, 384], strides = [1, 1]} : vector<4x422xbf16> to vector<4x384xbf16>
    %c4 = arith.constant 4 : index
    %c0_16 = arith.constant 0 : index
    %c0_17 = arith.constant 0 : index
    %26 = vector.load %arg2[%c4, %c0_16, %c0_17] : memref<9x8x4xbf16, #tpu.memory_space<vmem>>, vector<1x8x4xbf16>
    %27 = vector.shape_cast %26 : vector<1x8x4xbf16> to vector<8x4xbf16>
    %cst_18 = arith.constant dense<0.000000e+00> : vector<8x384xf32>
    %28 = tpu.matmul %27, %25, %cst_18 {dimension_numbers = #tpu.dot_dimension_numbers<[1], [0], [0], [1], [0, 0, 1, 1], [], []>} : vector<8x4xbf16>, vector<4x384xbf16>, vector<8x384xf32> -> vector<8x384xf32>
    %29 = arith.addf %24, %28 : vector<8x384xf32>
    %30 = vector.extract_strided_slice %1 {offsets = [0, 20], sizes = [4, 384], strides = [1, 1]} : vector<4x422xbf16> to vector<4x384xbf16>
    %c5 = arith.constant 5 : index
    %c0_19 = arith.constant 0 : index
    %c0_20 = arith.constant 0 : index
    %31 = vector.load %arg2[%c5, %c0_19, %c0_20] : memref<9x8x4xbf16, #tpu.memory_space<vmem>>, vector<1x8x4xbf16>
    %32 = vector.shape_cast %31 : vector<1x8x4xbf16> to vector<8x4xbf16>
    %cst_21 = arith.constant dense<0.000000e+00> : vector<8x384xf32>
    %33 = tpu.matmul %32, %30, %cst_21 {dimension_numbers = #tpu.dot_dimension_numbers<[1], [0], [0], [1], [0, 0, 1, 1], [], []>} : vector<8x4xbf16>, vector<4x384xbf16>, vector<8x384xf32> -> vector<8x384xf32>
    %34 = arith.addf %29, %33 : vector<8x384xf32>
    %35 = vector.extract_strided_slice %1 {offsets = [0, 36], sizes = [4, 384], strides = [1, 1]} : vector<4x422xbf16> to vector<4x384xbf16>
    %c6 = arith.constant 6 : index
    %c0_22 = arith.constant 0 : index
    %c0_23 = arith.constant 0 : index
    %36 = vector.load %arg2[%c6, %c0_22, %c0_23] : memref<9x8x4xbf16, #tpu.memory_space<vmem>>, vector<1x8x4xbf16>
    %37 = vector.shape_cast %36 : vector<1x8x4xbf16> to vector<8x4xbf16>
    %cst_24 = arith.constant dense<0.000000e+00> : vector<8x384xf32>
    %38 = tpu.matmul %37, %35, %cst_24 {dimension_numbers = #tpu.dot_dimension_numbers<[1], [0], [0], [1], [0, 0, 1, 1], [], []>} : vector<8x4xbf16>, vector<4x384xbf16>, vector<8x384xf32> -> vector<8x384xf32>
    %39 = arith.addf %34, %38 : vector<8x384xf32>
    %40 = vector.extract_strided_slice %1 {offsets = [0, 37], sizes = [4, 384], strides = [1, 1]} : vector<4x422xbf16> to vector<4x384xbf16>
    %c7 = arith.constant 7 : index
    %c0_25 = arith.constant 0 : index
    %c0_26 = arith.constant 0 : index
    %41 = vector.load %arg2[%c7, %c0_25, %c0_26] : memref<9x8x4xbf16, #tpu.memory_space<vmem>>, vector<1x8x4xbf16>
    %42 = vector.shape_cast %41 : vector<1x8x4xbf16> to vector<8x4xbf16>
    %cst_27 = arith.constant dense<0.000000e+00> : vector<8x384xf32>
    %43 = tpu.matmul %42, %40, %cst_27 {dimension_numbers = #tpu.dot_dimension_numbers<[1], [0], [0], [1], [0, 0, 1, 1], [], []>} : vector<8x4xbf16>, vector<4x384xbf16>, vector<8x384xf32> -> vector<8x384xf32>
    %44 = arith.addf %39, %43 : vector<8x384xf32>
    %45 = vector.extract_strided_slice %1 {offsets = [0, 38], sizes = [4, 384], strides = [1, 1]} : vector<4x422xbf16> to vector<4x384xbf16>
    %c8 = arith.constant 8 : index
    %c0_28 = arith.constant 0 : index
    %c0_29 = arith.constant 0 : index
    %46 = vector.load %arg2[%c8, %c0_28, %c0_29] : memref<9x8x4xbf16, #tpu.memory_space<vmem>>, vector<1x8x4xbf16>
    %47 = vector.shape_cast %46 : vector<1x8x4xbf16> to vector<8x4xbf16>
    %cst_30 = arith.constant dense<0.000000e+00> : vector<8x384xf32>
    %48 = tpu.matmul %47, %45, %cst_30 {dimension_numbers = #tpu.dot_dimension_numbers<[1], [0], [0], [1], [0, 0, 1, 1], [], []>} : vector<8x4xbf16>, vector<4x384xbf16>, vector<8x384xf32> -> vector<8x384xf32>
    %49 = arith.addf %44, %48 : vector<8x384xf32>
    %cst_31 = arith.constant 0.000000e+00 : f32
    %50 = vector.broadcast %cst_31 : f32 to vector<8x384xf32>
    %51 = arith.maximumf %49, %50 : vector<8x384xf32>
    %c0_32 = arith.constant 0 : index
    %c0_33 = arith.constant 0 : index
    %c0_34 = arith.constant 0 : index
    %52 = vector.load %arg4[%c0_32, %c0_33, %c0_34] : memref<1x8x384xf32, #tpu.memory_space<vmem>>, vector<1x8x384xf32>
    %53 = vector.shape_cast %52 : vector<1x8x384xf32> to vector<8x384xf32>
    %54 = vector.shape_cast %51 : vector<8x384xf32> to vector<1x8x384xf32>
    tpu.vector_store %arg4[%c0_32, %c0_33, %c0_34], %54 {strides = array<i32>} : memref<1x8x384xf32, #tpu.memory_space<vmem>>, vector<1x8x384xf32>,
    return
  }
  func.func @transform_0(%arg0: i32) -> (i32, i32, i32) {
    %c0_i32 = arith.constant 0 : i32
    %c0_i32_0 = arith.constant 0 : i32
    %c0_i32_1 = arith.constant 0 : i32
    return %arg0, %c0_i32, %c0_i32_0 : i32, i32, i32
  }
  func.func @transform_1(%arg0: i32) -> (i32, i32, i32) {
    %c0_i32 = arith.constant 0 : i32
    %c0_i32_0 = arith.constant 0 : i32
    %c0_i32_1 = arith.constant 0 : i32
    %c0_i32_2 = arith.constant 0 : i32
    return %c0_i32, %c0_i32_0, %c0_i32_1 : i32, i32, i32
  }
  func.func @transform_2(%arg0: i32) -> (i32, i32) {
    %c0_i32 = arith.constant 0 : i32
    %c0_i32_0 = arith.constant 0 : i32
    %c0_i32_1 = arith.constant 0 : i32
    return %c0_i32, %c0_i32_0 : i32, i32
  }
  func.func @transform_3(%arg0: i32) -> (i32, i32, i32) {
    %c0_i32 = arith.constant 0 : i32
    %c0_i32_0 = arith.constant 0 : i32
    %c0_i32_1 = arith.constant 0 : i32
    return %arg0, %c0_i32, %c0_i32_0 : i32, i32, i32
  }
}

</mosaic_0001>

<llo_original>
// kernel: tpu_custom_call.1
$region0: #{tpu_custom_call.1}
  #allocation0 [shape = 'u32[]', space=smem, size = 0x4, offset = 0x4, fixed_abs, tag = 'smem constant byte address 0x4 - core index']
  #allocation1 [shape = 'u32[144,128]{1,0:T(1,128)}', space=vmem, size = 0x12000, scoped, tag = 'internal scratch']
  %s0 = inlined_call_operand.vmem [shape: bf16[2,4,422], index: 0, kind: input, shape index: {}]
  %s1 = inlined_call_operand.vmem [shape: bf16[9,8,4], index: 1, kind: input, shape index: {}]
  %s2 = inlined_call_operand.vmem [shape: f32[8,1], index: 2, kind: input, shape index: {}]
  %s3 = inlined_call_operand.hbm [shape: f32[2,8,384], index: 3, kind: output, shape index: {}]
  %s4 = sld [smem:[#allocation0]]
  $region45: #{tpu_custom_call.1} parent=0
    _
  %s6 = ssub.s32 1, %s4
  %s7 = scalar_select 0, %s6, %s4
  $region1: #{tpu_custom_call.1} parent=0
    #allocation2 [shape = 'u8[24576]{0}', space=vmem, size = 0x6000, scoped, tag = 'output window, operand 0']
    #allocation3 [shape = 's32[2]{0}', space=sflag, size = 0x8, scoped, tag = 'scoped memory for tpu_custom_call.1']
    %8 = vsyncpa [#allocation3], 0
    %s9 = scalar_lea.sflag [#allocation3], 1
    %10 = vsyncpa %s9, 0
    loop: start=0, step=1, limit=4
    $region2: #{tpu_custom_call.1} parent=1 // loop_pre_header
      _
    $region3: #{tpu_custom_call.1} parent=1 // loop_header
      %s12 = sphi 0, %s16
      %p13 = scmp.ge.s32.totalorder %s12, 4
      %s22 = sphi 0, %s24
      %s25 = sphi 0, %s22
      %s26 = sphi 0, %s25
      %s42 = sphi 0, %s26
      %s46 = sphi 0, %s46
      %s48 = sphi 0, %s46
      %s49 = sphi 0, %s48
      %s63 = sphi 0, %s49
      %s67 = sphi 0, %s67
      %s69 = sphi 0, %s67
      %s70 = sphi 0, %s69
      %s84 = sphi 0, %s70
      %s90 = sphi 0, %s92
      %s93 = sphi 0, %s90
      %s94 = sphi 0, %s93
      %s110 = sphi 0, %s94
    $region4: #{tpu_custom_call.1} parent=1 // loop_header_branch
      %15 = sbr.rel (%p13) target = $region8
    $region5: #{tpu_custom_call.1} parent=1 // loop_body
      %s17 = ssub.s32 %s12, 1
      %s18 = ssub.s32 %s12, 2
      %s19 = sadd.s32 %s12, 1
      %s20 = ssub.s32 %s12, %s19
      %p21 = scmp.eq.s32.totalorder %s20, 0
      %s23 = sadd.s32 %s22, 1
      %s24 = scalar_select %p21, %s22, %s23
      %p27 = pneg %p21
      %p28 = scmp.eq.s32.totalorder %s12, 1
      %p29 = por %p27, %p28
      %p30 = scmp.ne.s32.totalorder %s22, %s25
      %p31 = scmp.eq.s32.totalorder %s12, 0
      %p32 = por %p30, %p31
      %p33 = scmp.ne.s32.totalorder %s22, %s25
      %p34 = scmp.eq.s32.totalorder %s17, 1
      %p35 = por %p33, %p34
      %p36 = scmp.ne.s32.totalorder %s25, %s26
      %p37 = scmp.eq.s32.totalorder %s17, 0
      %p38 = por %p36, %p37
      %p39 = scmp.ne.s32.totalorder %s25, %s26
      %p40 = scmp.eq.s32.totalorder %s18, 1
      %p41 = por %p39, %p40
      %p43 = scmp.ne.s32.totalorder %s26, %s42
      %p44 = scmp.eq.s32.totalorder %s18, 0
      %p45 = por %p43, %p44
      %s47 = sadd.s32 %s46, 1
      %p50 = scmp.eq.s32.totalorder %s12, 1
      %p51 = scmp.ne.s32.totalorder %s46, %s48
      %p52 = scmp.eq.s32.totalorder %s12, 0
      %p53 = por %p51, %p52
      %p54 = scmp.ne.s32.totalorder %s46, %s48
      %p55 = scmp.eq.s32.totalorder %s17, 1
      %p56 = por %p54, %p55
      %p57 = scmp.ne.s32.totalorder %s48, %s49
      %p58 = scmp.eq.s32.totalorder %s17, 0
      %p59 = por %p57, %p58
      %p60 = scmp.ne.s32.totalorder %s48, %s49
      %p61 = scmp.eq.s32.totalorder %s18, 1
      %p62 = por %p60, %p61
      %p64 = scmp.ne.s32.totalorder %s49, %s63
      %p65 = scmp.eq.s32.totalorder %s18, 0
      %p66 = por %p64, %p65
      %s68 = sadd.s32 %s67, 1
      %p71 = scmp.eq.s32.totalorder %s12, 1
      %p72 = scmp.ne.s32.totalorder %s67, %s69
      %p73 = scmp.eq.s32.totalorder %s12, 0
      %p74 = por %p72, %p73
      %p75 = scmp.ne.s32.totalorder %s67, %s69
      %p76 = scmp.eq.s32.totalorder %s17, 1
      %p77 = por %p75, %p76
      %p78 = scmp.ne.s32.totalorder %s69, %s70
      %p79 = scmp.eq.s32.totalorder %s17, 0
      %p80 = por %p78, %p79
      %p81 = scmp.ne.s32.totalorder %s69, %s70
      %p82 = scmp.eq.s32.totalorder %s18, 1
      %p83 = por %p81, %p82
      %p85 = scmp.ne.s32.totalorder %s70, %s84
      %p86 = scmp.eq.s32.totalorder %s18, 0
      %p87 = por %p85, %p86
      %s88 = ssub.s32 %s12, %s19
      %p89 = scmp.eq.s32.totalorder %s88, 0
      %s91 = sadd.s32 %s90, 1
      %s92 = scalar_select %p89, %s90, %s91
      %p95 = pneg %p89
      %p96 = scmp.eq.s32.totalorder %s12, 1
      %p97 = por %p95, %p96
      %p98 = scmp.ne.s32.totalorder %s90, %s93
      %p99 = scmp.eq.s32.totalorder %s12, 0
      %p100 = por %p98, %p99
      %p101 = scmp.ne.s32.totalorder %s90, %s93
      %p102 = scmp.eq.s32.totalorder %s17, 1
      %p103 = por %p101, %p102
      %p104 = scmp.ne.s32.totalorder %s93, %s94
      %p105 = scmp.eq.s32.totalorder %s17, 0
      %p106 = por %p104, %p105
      %p107 = scmp.ne.s32.totalorder %s93, %s94
      %p108 = scmp.eq.s32.totalorder %s18, 1
      %p109 = por %p107, %p108
      %p111 = scmp.ne.s32.totalorder %s94, %s110
      %p112 = scmp.eq.s32.totalorder %s18, 0
      %p113 = por %p111, %p112
      %p114 = scmp.le.s32.totalorder 1, %s12
      %p115 = scmp.lt.s32.totalorder %s12, 3
      %p116 = pnand %p114, %p115
      %p117 = pneg %p116
      // Predicated region
      $region9: #{tpu_custom_call.1} parent=5 // pred_check
        _
      $region10: #{tpu_custom_call.1} parent=5 // pred_check_branch
        %119 = sbr.rel (%p116) target = $region12
      $region11: #{tpu_custom_call.1} parent=5 // pred_region
        %s120 = ssub.s32 %s12, 1
        // Predicated region
        $region13: #{tpu_custom_call.1} parent=11 // pred_check
          %p121 = pneg %p59
        $region14: #{tpu_custom_call.1} parent=11 // pred_check_branch
          %123 = sbr.rel (%p121) target = $region16
        $region15: #{tpu_custom_call.1} parent=11 // pred_region
          _
        $region16: #{tpu_custom_call.1} parent=11 // pred_fallthru
          _
        // Predicated region
        $region17: #{tpu_custom_call.1} parent=11 // pred_check
          %p124 = pneg %p80
        $region18: #{tpu_custom_call.1} parent=11 // pred_check_branch
          %126 = sbr.rel (%p124) target = $region20
        $region19: #{tpu_custom_call.1} parent=11 // pred_region
          _
        $region20: #{tpu_custom_call.1} parent=11 // pred_fallthru
          _
      $region12: #{tpu_custom_call.1} parent=5 // pred_fallthru
        _
      %p127 = scmp.lt.s32.totalorder %s12, 2
      // Predicated region
      $region21: #{tpu_custom_call.1} parent=5 // pred_check
        %p128 = pneg %p127
      $region22: #{tpu_custom_call.1} parent=5 // pred_check_branch
        %130 = sbr.rel (%p128) target = $region24
      $region23: #{tpu_custom_call.1} parent=5 // pred_region
        // Predicated region
        $region25: #{tpu_custom_call.1} parent=23 // pred_check
          %p131 = pneg %p32
        $region26: #{tpu_custom_call.1} parent=23 // pred_check_branch
          %133 = sbr.rel (%p131) target = $region28
        $region27: #{tpu_custom_call.1} parent=23 // pred_region
          %p134 = scmp.lt.s32.totalorder %s12, 1
          %s135 = scalar_select %p134, %s12, 1
          %s136 = smul.addr %s135, 4
          %s137 = smul.addr %s136, 2
          %s138 = scalar_lea.vmem %s0, %s137
        $region28: #{tpu_custom_call.1} parent=23 // pred_fallthru
          _
      $region24: #{tpu_custom_call.1} parent=5 // pred_fallthru
        _
      %p139 = scmp.le.s32.totalorder 1, %s12
      %p140 = scmp.lt.s32.totalorder %s12, 3
      %p141 = pnand %p139, %p140
      %p142 = pneg %p141
      // Predicated region
      $region29: #{tpu_custom_call.1} parent=5 // pred_check
        _
      $region30: #{tpu_custom_call.1} parent=5 // pred_check_branch
        %144 = sbr.rel (%p141) target = $region32
      $region31: #{tpu_custom_call.1} parent=5 // pred_region
        %s145 = ssub.s32 %s12, 1
        %p146 = scmp.lt.s32.totalorder %s17, 1
        %s147 = scalar_select %p146, %s17, 1
        %s148 = smul.addr %s147, 4
        %s149 = smul.addr %s148, 2
        %s150 = scalar_lea.vmem %s0, %s149
        %p151 = pneg %p38
        %p152 = pneg %p35
        %p153 = pneg %p59
        %p154 = pneg %p56
        %p155 = pneg %p80
        %p156 = pneg %p77
        %p157 = pneg %p106
        %p158 = pneg %p103
        %s159 = sand.u32 %s93, 1
        %s160 = scalar_lea.sflag [#allocation3], %s159
        %s161 = sand.u32 %s93, 1
        %s162 = smul.addr %s161, 24
        %s163 = scalar_lea.vmem [#allocation2], %s162
        %p164 = scmp.lt.s32.totalorder %s17, 1
        %s165 = scalar_select %p164, %s17, 1
        %s166 = smul.addr %s165, 4
        %s167 = smul.addr %s166, 2
        %s168 = scalar_lea.vmem %s0, %s167
        %v170 = vld [vmem:[%s168] sm:$0xff]
        %v171 = vld [vmem:[%s2] sm:$0xff]
        %173 = vset.pattern.permute.xlu0 0
        %174 = vperm.xlu0 %173, %v171
        %v175 = vpop.permute.xlu0 %174
        %v177 = vld [vmem:[%s1] sm:$0xf]
        %v179 = vcombine.high %v170, %v170
        %v181 = vunpack.c.l.s4 1983009808
        %v182 = vunpack.c.0.s8 %v181
        %v183 = vlaneseq
        %v184 = vshrl.u32 %v183, 7
        %v185 = vsub.s32 %v182, %v184
        %v186 = vrot.slane %v170, %v185
        %v188 = vunpack.c.l.s4 1983009808
        %v189 = vunpack.c.0.s8 %v188
        %v190 = vlaneseq
        %v191 = vshrl.u32 %v190, 7
        %v192 = vsub.s32 %v189, %v191
        %v193 = vrot.slane %v179, %v192
        %v194 = vcombine.high %v186, %v186
        %vm195 = vcmask 31744
        %v197 = vsel %vm195, %v177, 0
        %vm199 = vcmask 1041408
        %v201 = vsel %vm199, %v186, 0
        %v204 = vsel %vm199, %v194, 0
        %v207 = vsel %vm199, %v193, 0
        %209 = vmatprep.subr.bf16.mxu0 %v204
        %210 = vmatpush1.bf16.msra.mxu0 %v201
        %211 = vmatprep.subr.bf16.mxu0 0
        %212 = vmatpush1.bf16.msra.mxu0 0
        %213 = vmatprep.subr.bf16.mxu0 0
        %214 = vmatpush1.bf16.msra.mxu0 0
        %215 = vmatprep.subr.bf16.mxu0 0
        %216 = vmatpush1.bf16.msra.mxu0 0
        %217 = vmatprep.subr.bf16.mxu0 0
        %218 = vmatpush1.bf16.msra.mxu0 0
        %219 = vmatprep.subr.bf16.mxu0 0
        %220 = vmatpush1.bf16.msra.mxu0 0
        %221 = vmatprep.subr.bf16.mxu0 0
        %222 = vmatpush1.bf16.msra.mxu0 0
        %223 = vmatprep.subr.bf16.mxu0 0
        %224 = vmatpush1.bf16.msra.mxu0 0
        %225 = vmatprep.subr.bf16.mxu0 0
        %226 = vmatpush1.bf16.msra.mxu0 0
        %227 = vmatprep.subr.bf16.mxu0 0
        %228 = vmatpush1.bf16.msra.mxu0 0
        %229 = vmatprep.subr.bf16.mxu0 0
        %230 = vmatpush1.bf16.msra.mxu0 0
        %231 = vmatprep.subr.bf16.mxu0 0
        %232 = vmatpush1.bf16.msra.mxu0 0
        %233 = vmatprep.subr.bf16.mxu0 0
        %234 = vmatpush1.bf16.msra.mxu0 0
        %235 = vmatprep.subr.bf16.mxu0 0
        %236 = vmatpush1.bf16.msra.mxu0 0
        %237 = vmatprep.subr.bf16.mxu0 0
        %238 = vmatpush1.bf16.msra.mxu0 0
        %239 = vmatprep.subr.bf16.mxu0 0
        %240 = vmatpush1.bf16.msra.mxu0 0
        %241 = vmatprep.mubr.bf16.mxu0 0
        %242 = vmatmul.mubr.bf16.gmra.mrb[0].mxu0 %v197
        %v243 = vpop.f32.mrb[0].mxu0
        %v244 = vadd.f32 0.0, %v243
        %v245 = vpop.f32.mrb[0].mxu0
        %v246 = vadd.f32 0.0, %v245
        %v247 = vpop.f32.mrb[0].mxu0
        %v248 = vpop.f32.mrb[0].mxu0
        %249 = vdwg.mxu0
        %250 = vmatprep.subr.bf16.mxu0 0
        %251 = vmatpush1.bf16.msra.mxu0 %v207
        %252 = vmatprep.subr.bf16.mxu0 0
        %253 = vmatpush1.bf16.msra.mxu0 0
        %254 = vmatprep.subr.bf16.mxu0 0
        %255 = vmatpush1.bf16.msra.mxu0 0
        %256 = vmatprep.subr.bf16.mxu0 0
        %257 = vmatpush1.bf16.msra.mxu0 0
        %258 = vmatprep.subr.bf16.mxu0 0
        %259 = vmatpush1.bf16.msra.mxu0 0
        %260 = vmatprep.subr.bf16.mxu0 0
        %261 = vmatpush1.bf16.msra.mxu0 0
        %262 = vmatprep.subr.bf16.mxu0 0
        %263 = vmatpush1.bf16.msra.mxu0 0
        %264 = vmatprep.subr.bf16.mxu0 0
        %265 = vmatpush1.bf16.msra.mxu0 0
        %266 = vmatprep.subr.bf16.mxu0 0
        %267 = vmatpush1.bf16.msra.mxu0 0
        %268 = vmatprep.subr.bf16.mxu0 0
        %269 = vmatpush1.bf16.msra.mxu0 0
        %270 = vmatprep.subr.bf16.mxu0 0
        %271 = vmatpush1.bf16.msra.mxu0 0
        %272 = vmatprep.subr.bf16.mxu0 0
        %273 = vmatpush1.bf16.msra.mxu0 0
        %274 = vmatprep.subr.bf16.mxu0 0
        %275 = vmatpush1.bf16.msra.mxu0 0
        %276 = vmatprep.subr.bf16.mxu0 0
        %277 = vmatpush1.bf16.msra.mxu0 0
        %278 = vmatprep.subr.bf16.mxu0 0
        %279 = vmatpush1.bf16.msra.mxu0 0
        %280 = vmatprep.subr.bf16.mxu0 0
        %281 = vmatpush1.bf16.msra.mxu0 0
        %282 = vmatprep.mubr.bf16.mxu0 0
        %283 = vmatmul.mubr.bf16.gmra.mrb[0].mxu0 %v197
        %v284 = vpop.f32.mrb[0].mxu0
        %v285 = vadd.f32 0.0, %v284
        %v286 = vpop.f32.mrb[0].mxu0
        %v287 = vpop.f32.mrb[0].mxu0
        %v288 = vpop.f32.mrb[0].mxu0
        %289 = vdwg.mxu0
        %v290 = vadd.f32 %v175, %v244
        %v291 = vadd.f32 %v175, %v246
        %v292 = vadd.f32 %v175, %v285
        %s293 = scalar_lea.vmem %s1, 4
        %v294 = vld [vmem:[%s293] sm:$0xf]
        %v295 = vcombine.high %v193, %v193
        %296 = vrot.lane.b32.xlu0 %v186, 127
        %v297 = vpop.permute.xlu0 %296
        %298 = vrot.lane.b32.xlu0 %v194, 127
        %v299 = vpop.permute.xlu0 %298
        %300 = vrot.lane.b32.xlu0 %v193, 127
        %v301 = vpop.permute.xlu0 %300
        %302 = vrot.lane.b32.xlu0 %v295, 127
        %v303 = vpop.permute.xlu0 %302
        %vm304 = vcmask 1039360
        %v305 = vsel %vm304, %v297, %v299
        %v306 = vsel %vm304, %v299, %v301
        %v307 = vsel %vm304, %v301, %v303
        %v309 = vsel %vm195, %v294, 0
        %v312 = vsel %vm199, %v305, 0
        %v315 = vsel %vm199, %v306, 0
        %v318 = vsel %vm199, %v307, 0
        %320 = vmatprep.subr.bf16.mxu0 %v315
        %321 = vmatpush1.bf16.msra.mxu0 %v312
        %322 = vmatprep.subr.bf16.mxu0 0
        %323 = vmatpush1.bf16.msra.mxu0 0
        %324 = vmatprep.subr.bf16.mxu0 0
        %325 = vmatpush1.bf16.msra.mxu0 0
        %326 = vmatprep.subr.bf16.mxu0 0
        %327 = vmatpush1.bf16.msra.mxu0 0
        %328 = vmatprep.subr.bf16.mxu0 0
        %329 = vmatpush1.bf16.msra.mxu0 0
        %330 = vmatprep.subr.bf16.mxu0 0
        %331 = vmatpush1.bf16.msra.mxu0 0
        %332 = vmatprep.subr.bf16.mxu0 0
        %333 = vmatpush1.bf16.msra.mxu0 0
        %334 = vmatprep.subr.bf16.mxu0 0
        %335 = vmatpush1.bf16.msra.mxu0 0
        %336 = vmatprep.subr.bf16.mxu0 0
        %337 = vmatpush1.bf16.msra.mxu0 0
        %338 = vmatprep.subr.bf16.mxu0 0
        %339 = vmatpush1.bf16.msra.mxu0 0
        %340 = vmatprep.subr.bf16.mxu0 0
        %341 = vmatpush1.bf16.msra.mxu0 0
        %342 = vmatprep.subr.bf16.mxu0 0
        %343 = vmatpush1.bf16.msra.mxu0 0
        %344 = vmatprep.subr.bf16.mxu0 0
        %345 = vmatpush1.bf16.msra.mxu0 0
        %346 = vmatprep.subr.bf16.mxu0 0
        %347 = vmatpush1.bf16.msra.mxu0 0
        %348 = vmatprep.subr.bf16.mxu0 0
        %349 = vmatpush1.bf16.msra.mxu0 0
        %350 = vmatprep.subr.bf16.mxu0 0
        %351 = vmatpush1.bf16.msra.mxu0 0
        %352 = vmatprep.mubr.bf16.mxu0 0
        %353 = vmatmul.mubr.bf16.gmra.mrb[0].mxu0 %v309
        %v354 = vpop.f32.mrb[0].mxu0
        %v355 = vadd.f32 0.0, %v354
        %v356 = vpop.f32.mrb[0].mxu0
        %v357 = vadd.f32 0.0, %v356
        %v358 = vpop.f32.mrb[0].mxu0
        %v359 = vpop.f32.mrb[0].mxu0
        %360 = vdwg.mxu0
        %361 = vmatprep.subr.bf16.mxu0 0
        %362 = vmatpush1.bf16.msra.mxu0 %v318
        %363 = vmatprep.subr.bf16.mxu0 0
        %364 = vmatpush1.bf16.msra.mxu0 0
        %365 = vmatprep.subr.bf16.mxu0 0
        %366 = vmatpush1.bf16.msra.mxu0 0
        %367 = vmatprep.subr.bf16.mxu0 0
        %368 = vmatpush1.bf16.msra.mxu0 0
        %369 = vmatprep.subr.bf16.mxu0 0
        %370 = vmatpush1.bf16.msra.mxu0 0
        %371 = vmatprep.subr.bf16.mxu0 0
        %372 = vmatpush1.bf16.msra.mxu0 0
        %373 = vmatprep.subr.bf16.mxu0 0
        %374 = vmatpush1.bf16.msra.mxu0 0
        %375 = vmatprep.subr.bf16.mxu0 0
        %376 = vmatpush1.bf16.msra.mxu0 0
        %377 = vmatprep.subr.bf16.mxu0 0
        %378 = vmatpush1.bf16.msra.mxu0 0
        %379 = vmatprep.subr.bf16.mxu0 0
        %380 = vmatpush1.bf16.msra.mxu0 0
        %381 = vmatprep.subr.bf16.mxu0 0
        %382 = vmatpush1.bf16.msra.mxu0 0
        %383 = vmatprep.subr.bf16.mxu0 0
        %384 = vmatpush1.bf16.msra.mxu0 0
        %385 = vmatprep.subr.bf16.mxu0 0
        %386 = vmatpush1.bf16.msra.mxu0 0
        %387 = vmatprep.subr.bf16.mxu0 0
        %388 = vmatpush1.bf16.msra.mxu0 0
        %389 = vmatprep.subr.bf16.mxu0 0
        %390 = vmatpush1.bf16.msra.mxu0 0
        %391 = vmatprep.subr.bf16.mxu0 0
        %392 = vmatpush1.bf16.msra.mxu0 0
        %393 = vmatprep.mubr.bf16.mxu0 0
        %394 = vmatmul.mubr.bf16.gmra.mrb[0].mxu0 %v309
        %v395 = vpop.f32.mrb[0].mxu0
        %v396 = vadd.f32 0.0, %v395
        %v397 = vpop.f32.mrb[0].mxu0
        %v398 = vpop.f32.mrb[0].mxu0
        %v399 = vpop.f32.mrb[0].mxu0
        %400 = vdwg.mxu0
        %v401 = vadd.f32 %v290, %v355
        %v402 = vadd.f32 %v291, %v357
        %v403 = vadd.f32 %v292, %v396
        %s404 = scalar_lea.vmem %s1, 8
        %v405 = vld [vmem:[%s404] sm:$0xf]
        %406 = vrot.lane.b32.xlu0 %v186, 126
        %v407 = vpop.permute.xlu0 %406
        %408 = vrot.lane.b32.xlu0 %v194, 126
        %v409 = vpop.permute.xlu0 %408
        %410 = vrot.lane.b32.xlu0 %v193, 126
        %v411 = vpop.permute.xlu0 %410
        %412 = vrot.lane.b32.xlu0 %v295, 126
        %v413 = vpop.permute.xlu0 %412
        %vm414 = vcmask 1031168
        %v415 = vsel %vm414, %v407, %v409
        %v416 = vsel %vm414, %v409, %v411
        %v417 = vsel %vm414, %v411, %v413
        %v419 = vsel %vm195, %v405, 0
        %v422 = vsel %vm199, %v415, 0
        %v425 = vsel %vm199, %v416, 0
        %v428 = vsel %vm199, %v417, 0
        %430 = vmatprep.subr.bf16.mxu0 %v425
        %431 = vmatpush1.bf16.msra.mxu0 %v422
        %432 = vmatprep.subr.bf16.mxu0 0
        %433 = vmatpush1.bf16.msra.mxu0 0
        %434 = vmatprep.subr.bf16.mxu0 0
        %435 = vmatpush1.bf16.msra.mxu0 0
        %436 = vmatprep.subr.bf16.mxu0 0
        %437 = vmatpush1.bf16.msra.mxu0 0
        %438 = vmatprep.subr.bf16.mxu0 0
        %439 = vmatpush1.bf16.msra.mxu0 0
        %440 = vmatprep.subr.bf16.mxu0 0
        %441 = vmatpush1.bf16.msra.mxu0 0
        %442 = vmatprep.subr.bf16.mxu0 0
        %443 = vmatpush1.bf16.msra.mxu0 0
        %444 = vmatprep.subr.bf16.mxu0 0
        %445 = vmatpush1.bf16.msra.mxu0 0
        %446 = vmatprep.subr.bf16.mxu0 0
        %447 = vmatpush1.bf16.msra.mxu0 0
        %448 = vmatprep.subr.bf16.mxu0 0
        %449 = vmatpush1.bf16.msra.mxu0 0
        %450 = vmatprep.subr.bf16.mxu0 0
        %451 = vmatpush1.bf16.msra.mxu0 0
        %452 = vmatprep.subr.bf16.mxu0 0
        %453 = vmatpush1.bf16.msra.mxu0 0
        %454 = vmatprep.subr.bf16.mxu0 0
        %455 = vmatpush1.bf16.msra.mxu0 0
        %456 = vmatprep.subr.bf16.mxu0 0
        %457 = vmatpush1.bf16.msra.mxu0 0
        %458 = vmatprep.subr.bf16.mxu0 0
        %459 = vmatpush1.bf16.msra.mxu0 0
        %460 = vmatprep.subr.bf16.mxu0 0
        %461 = vmatpush1.bf16.msra.mxu0 0
        %462 = vmatprep.mubr.bf16.mxu0 0
        %463 = vmatmul.mubr.bf16.gmra.mrb[0].mxu0 %v419
        %v464 = vpop.f32.mrb[0].mxu0
        %v465 = vadd.f32 0.0, %v464
        %v466 = vpop.f32.mrb[0].mxu0
        %v467 = vadd.f32 0.0, %v466
        %v468 = vpop.f32.mrb[0].mxu0
        %v469 = vpop.f32.mrb[0].mxu0
        %470 = vdwg.mxu0
        %471 = vmatprep.subr.bf16.mxu0 0
        %472 = vmatpush1.bf16.msra.mxu0 %v428
        %473 = vmatprep.subr.bf16.mxu0 0
        %474 = vmatpush1.bf16.msra.mxu0 0
        %475 = vmatprep.subr.bf16.mxu0 0
        %476 = vmatpush1.bf16.msra.mxu0 0
        %477 = vmatprep.subr.bf16.mxu0 0
        %478 = vmatpush1.bf16.msra.mxu0 0
        %479 = vmatprep.subr.bf16.mxu0 0
        %480 = vmatpush1.bf16.msra.mxu0 0
        %481 = vmatprep.subr.bf16.mxu0 0
        %482 = vmatpush1.bf16.msra.mxu0 0
        %483 = vmatprep.subr.bf16.mxu0 0
        %484 = vmatpush1.bf16.msra.mxu0 0
        %485 = vmatprep.subr.bf16.mxu0 0
        %486 = vmatpush1.bf16.msra.mxu0 0
        %487 = vmatprep.subr.bf16.mxu0 0
        %488 = vmatpush1.bf16.msra.mxu0 0
        %489 = vmatprep.subr.bf16.mxu0 0
        %490 = vmatpush1.bf16.msra.mxu0 0
        %491 = vmatprep.subr.bf16.mxu0 0
        %492 = vmatpush1.bf16.msra.mxu0 0
        %493 = vmatprep.subr.bf16.mxu0 0
        %494 = vmatpush1.bf16.msra.mxu0 0
        %495 = vmatprep.subr.bf16.mxu0 0
        %496 = vmatpush1.bf16.msra.mxu0 0
        %497 = vmatprep.subr.bf16.mxu0 0
        %498 = vmatpush1.bf16.msra.mxu0 0
        %499 = vmatprep.subr.bf16.mxu0 0
        %500 = vmatpush1.bf16.msra.mxu0 0
        %501 = vmatprep.subr.bf16.mxu0 0
        %502 = vmatpush1.bf16.msra.mxu0 0
        %503 = vmatprep.mubr.bf16.mxu0 0
        %504 = vmatmul.mubr.bf16.gmra.mrb[0].mxu0 %v419
        %v505 = vpop.f32.mrb[0].mxu0
        %v506 = vadd.f32 0.0, %v505
        %v507 = vpop.f32.mrb[0].mxu0
        %v508 = vpop.f32.mrb[0].mxu0
        %v509 = vpop.f32.mrb[0].mxu0
        %510 = vdwg.mxu0
        %v511 = vadd.f32 %v401, %v465
        %v512 = vadd.f32 %v402, %v467
        %v513 = vadd.f32 %v403, %v506
        %s514 = scalar_lea.vmem %s1, 12
        %v515 = vld [vmem:[%s514] sm:$0xf]
        %516 = vrot.lane.b32.xlu0 %v186, 110
        %v517 = vpop.permute.xlu0 %516
        %518 = vrot.lane.b32.xlu0 %v194, 110
        %v519 = vpop.permute.xlu0 %518
        %520 = vrot.lane.b32.xlu0 %v193, 110
        %v521 = vpop.permute.xlu0 %520
        %522 = vrot.lane.b32.xlu0 %v295, 110
        %v523 = vpop.permute.xlu0 %522
        %vm524 = vcmask 900096
        %v525 = vsel %vm524, %v517, %v519
        %v526 = vsel %vm524, %v519, %v521
        %v527 = vsel %vm524, %v521, %v523
        %v529 = vsel %vm195, %v515, 0
        %v532 = vsel %vm199, %v525, 0
        %v535 = vsel %vm199, %v526, 0
        %v538 = vsel %vm199, %v527, 0
        %540 = vmatprep.subr.bf16.mxu0 %v535
        %541 = vmatpush1.bf16.msra.mxu0 %v532
        %542 = vmatprep.subr.bf16.mxu0 0
        %543 = vmatpush1.bf16.msra.mxu0 0
        %544 = vmatprep.subr.bf16.mxu0 0
        %545 = vmatpush1.bf16.msra.mxu0 0
        %546 = vmatprep.subr.bf16.mxu0 0
        %547 = vmatpush1.bf16.msra.mxu0 0
        %548 = vmatprep.subr.bf16.mxu0 0
        %549 = vmatpush1.bf16.msra.mxu0 0
        %550 = vmatprep.subr.bf16.mxu0 0
        %551 = vmatpush1.bf16.msra.mxu0 0
        %552 = vmatprep.subr.bf16.mxu0 0
        %553 = vmatpush1.bf16.msra.mxu0 0
        %554 = vmatprep.subr.bf16.mxu0 0
        %555 = vmatpush1.bf16.msra.mxu0 0
        %556 = vmatprep.subr.bf16.mxu0 0
        %557 = vmatpush1.bf16.msra.mxu0 0
        %558 = vmatprep.subr.bf16.mxu0 0
        %559 = vmatpush1.bf16.msra.mxu0 0
        %560 = vmatprep.subr.bf16.mxu0 0
        %561 = vmatpush1.bf16.msra.mxu0 0
        %562 = vmatprep.subr.bf16.mxu0 0
        %563 = vmatpush1.bf16.msra.mxu0 0
        %564 = vmatprep.subr.bf16.mxu0 0
        %565 = vmatpush1.bf16.msra.mxu0 0
        %566 = vmatprep.subr.bf16.mxu0 0
        %567 = vmatpush1.bf16.msra.mxu0 0
        %568 = vmatprep.subr.bf16.mxu0 0
        %569 = vmatpush1.bf16.msra.mxu0 0
        %570 = vmatprep.subr.bf16.mxu0 0
        %571 = vmatpush1.bf16.msra.mxu0 0
        %572 = vmatprep.mubr.bf16.mxu0 0
        %573 = vmatmul.mubr.bf16.gmra.mrb[0].mxu0 %v529
        %v574 = vpop.f32.mrb[0].mxu0
        %v575 = vadd.f32 0.0, %v574
        %v576 = vpop.f32.mrb[0].mxu0
        %v577 = vadd.f32 0.0, %v576
        %v578 = vpop.f32.mrb[0].mxu0
        %v579 = vpop.f32.mrb[0].mxu0
        %580 = vdwg.mxu0
        %581 = vmatprep.subr.bf16.mxu0 0
        %582 = vmatpush1.bf16.msra.mxu0 %v538
        %583 = vmatprep.subr.bf16.mxu0 0
        %584 = vmatpush1.bf16.msra.mxu0 0
        %585 = vmatprep.subr.bf16.mxu0 0
        %586 = vmatpush1.bf16.msra.mxu0 0
        %587 = vmatprep.subr.bf16.mxu0 0
        %588 = vmatpush1.bf16.msra.mxu0 0
        %589 = vmatprep.subr.bf16.mxu0 0
        %590 = vmatpush1.bf16.msra.mxu0 0
        %591 = vmatprep.subr.bf16.mxu0 0
        %592 = vmatpush1.bf16.msra.mxu0 0
        %593 = vmatprep.subr.bf16.mxu0 0
        %594 = vmatpush1.bf16.msra.mxu0 0
        %595 = vmatprep.subr.bf16.mxu0 0
        %596 = vmatpush1.bf16.msra.mxu0 0
        %597 = vmatprep.subr.bf16.mxu0 0
        %598 = vmatpush1.bf16.msra.mxu0 0
        %599 = vmatprep.subr.bf16.mxu0 0
        %600 = vmatpush1.bf16.msra.mxu0 0
        %601 = vmatprep.subr.bf16.mxu0 0
        %602 = vmatpush1.bf16.msra.mxu0 0
        %603 = vmatprep.subr.bf16.mxu0 0
        %604 = vmatpush1.bf16.msra.mxu0 0
        %605 = vmatprep.subr.bf16.mxu0 0
        %606 = vmatpush1.bf16.msra.mxu0 0
        %607 = vmatprep.subr.bf16.mxu0 0
        %608 = vmatpush1.bf16.msra.mxu0 0
        %609 = vmatprep.subr.bf16.mxu0 0
        %610 = vmatpush1.bf16.msra.mxu0 0
        %611 = vmatprep.subr.bf16.mxu0 0
        %612 = vmatpush1.bf16.msra.mxu0 0
        %613 = vmatprep.mubr.bf16.mxu0 0
        %614 = vmatmul.mubr.bf16.gmra.mrb[0].mxu0 %v529
        %v615 = vpop.f32.mrb[0].mxu0
        %v616 = vadd.f32 0.0, %v615
        %v617 = vpop.f32.mrb[0].mxu0
        %v618 = vpop.f32.mrb[0].mxu0
        %v619 = vpop.f32.mrb[0].mxu0
        %620 = vdwg.mxu0
        %v621 = vadd.f32 %v511, %v575
        %v622 = vadd.f32 %v512, %v577
        %v623 = vadd.f32 %v513, %v616
        %s624 = scalar_lea.vmem %s1, 16
        %v625 = vld [vmem:[%s624] sm:$0xf]
        %626 = vrot.lane.b32.xlu0 %v186, 109
        %v627 = vpop.permute.xlu0 %626
        %628 = vrot.lane.b32.xlu0 %v194, 109
        %v629 = vpop.permute.xlu0 %628
        %630 = vrot.lane.b32.xlu0 %v193, 109
        %v631 = vpop.permute.xlu0 %630
        %632 = vrot.lane.b32.xlu0 %v295, 109
        %v633 = vpop.permute.xlu0 %632
        %vm634 = vcmask 891904
        %v635 = vsel %vm634, %v627, %v629
        %v636 = vsel %vm634, %v629, %v631
        %v637 = vsel %vm634, %v631, %v633
        %v639 = vsel %vm195, %v625, 0
        %v642 = vsel %vm199, %v635, 0
        %v645 = vsel %vm199, %v636, 0
        %v648 = vsel %vm199, %v637, 0
        %650 = vmatprep.subr.bf16.mxu0 %v645
        %651 = vmatpush1.bf16.msra.mxu0 %v642
        %652 = vmatprep.subr.bf16.mxu0 0
        %653 = vmatpush1.bf16.msra.mxu0 0
        %654 = vmatprep.subr.bf16.mxu0 0
        %655 = vmatpush1.bf16.msra.mxu0 0
        %656 = vmatprep.subr.bf16.mxu0 0
        %657 = vmatpush1.bf16.msra.mxu0 0
        %658 = vmatprep.subr.bf16.mxu0 0
        %659 = vmatpush1.bf16.msra.mxu0 0
        %660 = vmatprep.subr.bf16.mxu0 0
        %661 = vmatpush1.bf16.msra.mxu0 0
        %662 = vmatprep.subr.bf16.mxu0 0
        %663 = vmatpush1.bf16.msra.mxu0 0
        %664 = vmatprep.subr.bf16.mxu0 0
        %665 = vmatpush1.bf16.msra.mxu0 0
        %666 = vmatprep.subr.bf16.mxu0 0
        %667 = vmatpush1.bf16.msra.mxu0 0
        %668 = vmatprep.subr.bf16.mxu0 0
        %669 = vmatpush1.bf16.msra.mxu0 0
        %670 = vmatprep.subr.bf16.mxu0 0
        %671 = vmatpush1.bf16.msra.mxu0 0
        %672 = vmatprep.subr.bf16.mxu0 0
        %673 = vmatpush1.bf16.msra.mxu0 0
        %674 = vmatprep.subr.bf16.mxu0 0
        %675 = vmatpush1.bf16.msra.mxu0 0
        %676 = vmatprep.subr.bf16.mxu0 0
        %677 = vmatpush1.bf16.msra.mxu0 0
        %678 = vmatprep.subr.bf16.mxu0 0
        %679 = vmatpush1.bf16.msra.mxu0 0
        %680 = vmatprep.subr.bf16.mxu0 0
        %681 = vmatpush1.bf16.msra.mxu0 0
        %682 = vmatprep.mubr.bf16.mxu0 0
        %683 = vmatmul.mubr.bf16.gmra.mrb[0].mxu0 %v639
        %v684 = vpop.f32.mrb[0].mxu0
        %v685 = vadd.f32 0.0, %v684
        %v686 = vpop.f32.mrb[0].mxu0
        %v687 = vadd.f32 0.0, %v686
        %v688 = vpop.f32.mrb[0].mxu0
        %v689 = vpop.f32.mrb[0].mxu0
        %690 = vdwg.mxu0
        %691 = vmatprep.subr.bf16.mxu0 0
        %692 = vmatpush1.bf16.msra.mxu0 %v648
        %693 = vmatprep.subr.bf16.mxu0 0
        %694 = vmatpush1.bf16.msra.mxu0 0
        %695 = vmatprep.subr.bf16.mxu0 0
        %696 = vmatpush1.bf16.msra.mxu0 0
        %697 = vmatprep.subr.bf16.mxu0 0
        %698 = vmatpush1.bf16.msra.mxu0 0
        %699 = vmatprep.subr.bf16.mxu0 0
        %700 = vmatpush1.bf16.msra.mxu0 0
        %701 = vmatprep.subr.bf16.mxu0 0
        %702 = vmatpush1.bf16.msra.mxu0 0
        %703 = vmatprep.subr.bf16.mxu0 0
        %704 = vmatpush1.bf16.msra.mxu0 0
        %705 = vmatprep.subr.bf16.mxu0 0
        %706 = vmatpush1.bf16.msra.mxu0 0
        %707 = vmatprep.subr.bf16.mxu0 0
        %708 = vmatpush1.bf16.msra.mxu0 0
        %709 = vmatprep.subr.bf16.mxu0 0
        %710 = vmatpush1.bf16.msra.mxu0 0
        %711 = vmatprep.subr.bf16.mxu0 0
        %712 = vmatpush1.bf16.msra.mxu0 0
        %713 = vmatprep.subr.bf16.mxu0 0
        %714 = vmatpush1.bf16.msra.mxu0 0
        %715 = vmatprep.subr.bf16.mxu0 0
        %716 = vmatpush1.bf16.msra.mxu0 0
        %717 = vmatprep.subr.bf16.mxu0 0
        %718 = vmatpush1.bf16.msra.mxu0 0
        %719 = vmatprep.subr.bf16.mxu0 0
        %720 = vmatpush1.bf16.msra.mxu0 0
        %721 = vmatprep.subr.bf16.mxu0 0
        %722 = vmatpush1.bf16.msra.mxu0 0
        %723 = vmatprep.mubr.bf16.mxu0 0
        %724 = vmatmul.mubr.bf16.gmra.mrb[0].mxu0 %v639
        %v725 = vpop.f32.mrb[0].mxu0
        %v726 = vadd.f32 0.0, %v725
        %v727 = vpop.f32.mrb[0].mxu0
        %v728 = vpop.f32.mrb[0].mxu0
        %v729 = vpop.f32.mrb[0].mxu0
        %730 = vdwg.mxu0
        %v731 = vadd.f32 %v621, %v685
        %v732 = vadd.f32 %v622, %v687
        %v733 = vadd.f32 %v623, %v726
        %s734 = scalar_lea.vmem %s1, 20
        %v735 = vld [vmem:[%s734] sm:$0xf]
        %736 = vrot.lane.b32.xlu0 %v186, 108
        %v737 = vpop.permute.xlu0 %736
        %738 = vrot.lane.b32.xlu0 %v194, 108
        %v739 = vpop.permute.xlu0 %738
        %740 = vrot.lane.b32.xlu0 %v193, 108
        %v741 = vpop.permute.xlu0 %740
        %742 = vrot.lane.b32.xlu0 %v295, 108
        %v743 = vpop.permute.xlu0 %742
        %vm744 = vcmask 883712
        %v745 = vsel %vm744, %v737, %v739
        %v746 = vsel %vm744, %v739, %v741
        %v747 = vsel %vm744, %v741, %v743
        %v749 = vsel %vm195, %v735, 0
        %v752 = vsel %vm199, %v745, 0
        %v755 = vsel %vm199, %v746, 0
        %v758 = vsel %vm199, %v747, 0
        %760 = vmatprep.subr.bf16.mxu0 %v755
        %761 = vmatpush1.bf16.msra.mxu0 %v752
        %762 = vmatprep.subr.bf16.mxu0 0
        %763 = vmatpush1.bf16.msra.mxu0 0
        %764 = vmatprep.subr.bf16.mxu0 0
        %765 = vmatpush1.bf16.msra.mxu0 0
        %766 = vmatprep.subr.bf16.mxu0 0
        %767 = vmatpush1.bf16.msra.mxu0 0
        %768 = vmatprep.subr.bf16.mxu0 0
        %769 = vmatpush1.bf16.msra.mxu0 0
        %770 = vmatprep.subr.bf16.mxu0 0
        %771 = vmatpush1.bf16.msra.mxu0 0
        %772 = vmatprep.subr.bf16.mxu0 0
        %773 = vmatpush1.bf16.msra.mxu0 0
        %774 = vmatprep.subr.bf16.mxu0 0
        %775 = vmatpush1.bf16.msra.mxu0 0
        %776 = vmatprep.subr.bf16.mxu0 0
        %777 = vmatpush1.bf16.msra.mxu0 0
        %778 = vmatprep.subr.bf16.mxu0 0
        %779 = vmatpush1.bf16.msra.mxu0 0
        %780 = vmatprep.subr.bf16.mxu0 0
        %781 = vmatpush1.bf16.msra.mxu0 0
        %782 = vmatprep.subr.bf16.mxu0 0
        %783 = vmatpush1.bf16.msra.mxu0 0
        %784 = vmatprep.subr.bf16.mxu0 0
        %785 = vmatpush1.bf16.msra.mxu0 0
        %786 = vmatprep.subr.bf16.mxu0 0
        %787 = vmatpush1.bf16.msra.mxu0 0
        %788 = vmatprep.subr.bf16.mxu0 0
        %789 = vmatpush1.bf16.msra.mxu0 0
        %790 = vmatprep.subr.bf16.mxu0 0
        %791 = vmatpush1.bf16.msra.mxu0 0
        %792 = vmatprep.mubr.bf16.mxu0 0
        %793 = vmatmul.mubr.bf16.gmra.mrb[0].mxu0 %v749
        %v794 = vpop.f32.mrb[0].mxu0
        %v795 = vadd.f32 0.0, %v794
        %v796 = vpop.f32.mrb[0].mxu0
        %v797 = vadd.f32 0.0, %v796
        %v798 = vpop.f32.mrb[0].mxu0
        %v799 = vpop.f32.mrb[0].mxu0
        %800 = vdwg.mxu0
        %801 = vmatprep.subr.bf16.mxu0 0
        %802 = vmatpush1.bf16.msra.mxu0 %v758
        %803 = vmatprep.subr.bf16.mxu0 0
        %804 = vmatpush1.bf16.msra.mxu0 0
        %805 = vmatprep.subr.bf16.mxu0 0
        %806 = vmatpush1.bf16.msra.mxu0 0
        %807 = vmatprep.subr.bf16.mxu0 0
        %808 = vmatpush1.bf16.msra.mxu0 0
        %809 = vmatprep.subr.bf16.mxu0 0
        %810 = vmatpush1.bf16.msra.mxu0 0
        %811 = vmatprep.subr.bf16.mxu0 0
        %812 = vmatpush1.bf16.msra.mxu0 0
        %813 = vmatprep.subr.bf16.mxu0 0
        %814 = vmatpush1.bf16.msra.mxu0 0
        %815 = vmatprep.subr.bf16.mxu0 0
        %816 = vmatpush1.bf16.msra.mxu0 0
        %817 = vmatprep.subr.bf16.mxu0 0
        %818 = vmatpush1.bf16.msra.mxu0 0
        %819 = vmatprep.subr.bf16.mxu0 0
        %820 = vmatpush1.bf16.msra.mxu0 0
        %821 = vmatprep.subr.bf16.mxu0 0
        %822 = vmatpush1.bf16.msra.mxu0 0
        %823 = vmatprep.subr.bf16.mxu0 0
        %824 = vmatpush1.bf16.msra.mxu0 0
        %825 = vmatprep.subr.bf16.mxu0 0
        %826 = vmatpush1.bf16.msra.mxu0 0
        %827 = vmatprep.subr.bf16.mxu0 0
        %828 = vmatpush1.bf16.msra.mxu0 0
        %829 = vmatprep.subr.bf16.mxu0 0
        %830 = vmatpush1.bf16.msra.mxu0 0
        %831 = vmatprep.subr.bf16.mxu0 0
        %832 = vmatpush1.bf16.msra.mxu0 0
        %833 = vmatprep.mubr.bf16.mxu0 0
        %834 = vmatmul.mubr.bf16.gmra.mrb[0].mxu0 %v749
        %v835 = vpop.f32.mrb[0].mxu0
        %v836 = vadd.f32 0.0, %v835
        %v837 = vpop.f32.mrb[0].mxu0
        %v838 = vpop.f32.mrb[0].mxu0
        %v839 = vpop.f32.mrb[0].mxu0
        %840 = vdwg.mxu0
        %v841 = vadd.f32 %v731, %v795
        %v842 = vadd.f32 %v732, %v797
        %v843 = vadd.f32 %v733, %v836
        %s844 = scalar_lea.vmem %s1, 24
        %v845 = vld [vmem:[%s844] sm:$0xf]
        %846 = vrot.lane.b32.xlu0 %v186, 92
        %v847 = vpop.permute.xlu0 %846
        %848 = vrot.lane.b32.xlu0 %v194, 92
        %v849 = vpop.permute.xlu0 %848
        %850 = vrot.lane.b32.xlu0 %v193, 92
        %v851 = vpop.permute.xlu0 %850
        %852 = vrot.lane.b32.xlu0 %v295, 92
        %v853 = vpop.permute.xlu0 %852
        %vm854 = vcmask 752640
        %v855 = vsel %vm854, %v847, %v849
        %v856 = vsel %vm854, %v849, %v851
        %v857 = vsel %vm854, %v851, %v853
        %v859 = vsel %vm195, %v845, 0
        %v862 = vsel %vm199, %v855, 0
        %v865 = vsel %vm199, %v856, 0
        %v868 = vsel %vm199, %v857, 0
        %870 = vmatprep.subr.bf16.mxu0 %v865
        %871 = vmatpush1.bf16.msra.mxu0 %v862
        %872 = vmatprep.subr.bf16.mxu0 0
        %873 = vmatpush1.bf16.msra.mxu0 0
        %874 = vmatprep.subr.bf16.mxu0 0
        %875 = vmatpush1.bf16.msra.mxu0 0
        %876 = vmatprep.subr.bf16.mxu0 0
        %877 = vmatpush1.bf16.msra.mxu0 0
        %878 = vmatprep.subr.bf16.mxu0 0
        %879 = vmatpush1.bf16.msra.mxu0 0
        %880 = vmatprep.subr.bf16.mxu0 0
        %881 = vmatpush1.bf16.msra.mxu0 0
        %882 = vmatprep.subr.bf16.mxu0 0
        %883 = vmatpush1.bf16.msra.mxu0 0
        %884 = vmatprep.subr.bf16.mxu0 0
        %885 = vmatpush1.bf16.msra.mxu0 0
        %886 = vmatprep.subr.bf16.mxu0 0
        %887 = vmatpush1.bf16.msra.mxu0 0
        %888 = vmatprep.subr.bf16.mxu0 0
        %889 = vmatpush1.bf16.msra.mxu0 0
        %890 = vmatprep.subr.bf16.mxu0 0
        %891 = vmatpush1.bf16.msra.mxu0 0
        %892 = vmatprep.subr.bf16.mxu0 0
        %893 = vmatpush1.bf16.msra.mxu0 0
        %894 = vmatprep.subr.bf16.mxu0 0
        %895 = vmatpush1.bf16.msra.mxu0 0
        %896 = vmatprep.subr.bf16.mxu0 0
        %897 = vmatpush1.bf16.msra.mxu0 0
        %898 = vmatprep.subr.bf16.mxu0 0
        %899 = vmatpush1.bf16.msra.mxu0 0
        %900 = vmatprep.subr.bf16.mxu0 0
        %901 = vmatpush1.bf16.msra.mxu0 0
        %902 = vmatprep.mubr.bf16.mxu0 0
        %903 = vmatmul.mubr.bf16.gmra.mrb[0].mxu0 %v859
        %v904 = vpop.f32.mrb[0].mxu0
        %v905 = vadd.f32 0.0, %v904
        %v906 = vpop.f32.mrb[0].mxu0
        %v907 = vadd.f32 0.0, %v906
        %v908 = vpop.f32.mrb[0].mxu0
        %v909 = vpop.f32.mrb[0].mxu0
        %910 = vdwg.mxu0
        %911 = vmatprep.subr.bf16.mxu0 0
        %912 = vmatpush1.bf16.msra.mxu0 %v868
        %913 = vmatprep.subr.bf16.mxu0 0
        %914 = vmatpush1.bf16.msra.mxu0 0
        %915 = vmatprep.subr.bf16.mxu0 0
        %916 = vmatpush1.bf16.msra.mxu0 0
        %917 = vmatprep.subr.bf16.mxu0 0
        %918 = vmatpush1.bf16.msra.mxu0 0
        %919 = vmatprep.subr.bf16.mxu0 0
        %920 = vmatpush1.bf16.msra.mxu0 0
        %921 = vmatprep.subr.bf16.mxu0 0
        %922 = vmatpush1.bf16.msra.mxu0 0
        %923 = vmatprep.subr.bf16.mxu0 0
        %924 = vmatpush1.bf16.msra.mxu0 0
        %925 = vmatprep.subr.bf16.mxu0 0
        %926 = vmatpush1.bf16.msra.mxu0 0
        %927 = vmatprep.subr.bf16.mxu0 0
        %928 = vmatpush1.bf16.msra.mxu0 0
        %929 = vmatprep.subr.bf16.mxu0 0
        %930 = vmatpush1.bf16.msra.mxu0 0
        %931 = vmatprep.subr.bf16.mxu0 0
        %932 = vmatpush1.bf16.msra.mxu0 0
        %933 = vmatprep.subr.bf16.mxu0 0
        %934 = vmatpush1.bf16.msra.mxu0 0
        %935 = vmatprep.subr.bf16.mxu0 0
        %936 = vmatpush1.bf16.msra.mxu0 0
        %937 = vmatprep.subr.bf16.mxu0 0
        %938 = vmatpush1.bf16.msra.mxu0 0
        %939 = vmatprep.subr.bf16.mxu0 0
        %940 = vmatpush1.bf16.msra.mxu0 0
        %941 = vmatprep.subr.bf16.mxu0 0
        %942 = vmatpush1.bf16.msra.mxu0 0
        %943 = vmatprep.mubr.bf16.mxu0 0
        %944 = vmatmul.mubr.bf16.gmra.mrb[0].mxu0 %v859
        %v945 = vpop.f32.mrb[0].mxu0
        %v946 = vadd.f32 0.0, %v945
        %v947 = vpop.f32.mrb[0].mxu0
        %v948 = vpop.f32.mrb[0].mxu0
        %v949 = vpop.f32.mrb[0].mxu0
        %950 = vdwg.mxu0
        %v951 = vadd.f32 %v841, %v905
        %v952 = vadd.f32 %v842, %v907
        %v953 = vadd.f32 %v843, %v946
        %s954 = scalar_lea.vmem %s1, 28
        %v955 = vld [vmem:[%s954] sm:$0xf]
        %956 = vrot.lane.b32.xlu0 %v186, 91
        %v957 = vpop.permute.xlu0 %956
        %958 = vrot.lane.b32.xlu0 %v194, 91
        %v959 = vpop.permute.xlu0 %958
        %960 = vrot.lane.b32.xlu0 %v193, 91
        %v961 = vpop.permute.xlu0 %960
        %962 = vrot.lane.b32.xlu0 %v295, 91
        %v963 = vpop.permute.xlu0 %962
        %vm964 = vcmask 744448
        %v965 = vsel %vm964, %v957, %v959
        %v966 = vsel %vm964, %v959, %v961
        %v967 = vsel %vm964, %v961, %v963
        %v969 = vsel %vm195, %v955, 0
        %v972 = vsel %vm199, %v965, 0
        %v975 = vsel %vm199, %v966, 0
        %v978 = vsel %vm199, %v967, 0
        %980 = vmatprep.subr.bf16.mxu0 %v975
        %981 = vmatpush1.bf16.msra.mxu0 %v972
        %982 = vmatprep.subr.bf16.mxu0 0
        %983 = vmatpush1.bf16.msra.mxu0 0
        %984 = vmatprep.subr.bf16.mxu0 0
        %985 = vmatpush1.bf16.msra.mxu0 0
        %986 = vmatprep.subr.bf16.mxu0 0
        %987 = vmatpush1.bf16.msra.mxu0 0
        %988 = vmatprep.subr.bf16.mxu0 0
        %989 = vmatpush1.bf16.msra.mxu0 0
        %990 = vmatprep.subr.bf16.mxu0 0
        %991 = vmatpush1.bf16.msra.mxu0 0
        %992 = vmatprep.subr.bf16.mxu0 0
        %993 = vmatpush1.bf16.msra.mxu0 0
        %994 = vmatprep.subr.bf16.mxu0 0
        %995 = vmatpush1.bf16.msra.mxu0 0
        %996 = vmatprep.subr.bf16.mxu0 0
        %997 = vmatpush1.bf16.msra.mxu0 0
        %998 = vmatprep.subr.bf16.mxu0 0
        %999 = vmatpush1.bf16.msra.mxu0 0
        %1000 = vmatprep.subr.bf16.mxu0 0
        %1001 = vmatpush1.bf16.msra.mxu0 0
        %1002 = vmatprep.subr.bf16.mxu0 0
        %1003 = vmatpush1.bf16.msra.mxu0 0
        %1004 = vmatprep.subr.bf16.mxu0 0
        %1005 = vmatpush1.bf16.msra.mxu0 0
        %1006 = vmatprep.subr.bf16.mxu0 0
        %1007 = vmatpush1.bf16.msra.mxu0 0
        %1008 = vmatprep.subr.bf16.mxu0 0
        %1009 = vmatpush1.bf16.msra.mxu0 0
        %1010 = vmatprep.subr.bf16.mxu0 0
        %1011 = vmatpush1.bf16.msra.mxu0 0
        %1012 = vmatprep.mubr.bf16.mxu0 0
        %1013 = vmatmul.mubr.bf16.gmra.mrb[0].mxu0 %v969
        %v1014 = vpop.f32.mrb[0].mxu0
        %v1015 = vadd.f32 0.0, %v1014
        %v1016 = vpop.f32.mrb[0].mxu0
        %v1017 = vadd.f32 0.0, %v1016
        %v1018 = vpop.f32.mrb[0].mxu0
        %v1019 = vpop.f32.mrb[0].mxu0
        %1020 = vdwg.mxu0
        %1021 = vmatprep.subr.bf16.mxu0 0
        %1022 = vmatpush1.bf16.msra.mxu0 %v978
        %1023 = vmatprep.subr.bf16.mxu0 0
        %1024 = vmatpush1.bf16.msra.mxu0 0
        %1025 = vmatprep.subr.bf16.mxu0 0
        %1026 = vmatpush1.bf16.msra.mxu0 0
        %1027 = vmatprep.subr.bf16.mxu0 0
        %1028 = vmatpush1.bf16.msra.mxu0 0
        %1029 = vmatprep.subr.bf16.mxu0 0
        %1030 = vmatpush1.bf16.msra.mxu0 0
        %1031 = vmatprep.subr.bf16.mxu0 0
        %1032 = vmatpush1.bf16.msra.mxu0 0
        %1033 = vmatprep.subr.bf16.mxu0 0
        %1034 = vmatpush1.bf16.msra.mxu0 0
        %1035 = vmatprep.subr.bf16.mxu0 0
        %1036 = vmatpush1.bf16.msra.mxu0 0
        %1037 = vmatprep.subr.bf16.mxu0 0
        %1038 = vmatpush1.bf16.msra.mxu0 0
        %1039 = vmatprep.subr.bf16.mxu0 0
        %1040 = vmatpush1.bf16.msra.mxu0 0
        %1041 = vmatprep.subr.bf16.mxu0 0
        %1042 = vmatpush1.bf16.msra.mxu0 0
        %1043 = vmatprep.subr.bf16.mxu0 0
        %1044 = vmatpush1.bf16.msra.mxu0 0
        %1045 = vmatprep.subr.bf16.mxu0 0
        %1046 = vmatpush1.bf16.msra.mxu0 0
        %1047 = vmatprep.subr.bf16.mxu0 0
        %1048 = vmatpush1.bf16.msra.mxu0 0
        %1049 = vmatprep.subr.bf16.mxu0 0
        %1050 = vmatpush1.bf16.msra.mxu0 0
        %1051 = vmatprep.subr.bf16.mxu0 0
        %1052 = vmatpush1.bf16.msra.mxu0 0
        %1053 = vmatprep.mubr.bf16.mxu0 0
        %1054 = vmatmul.mubr.bf16.gmra.mrb[0].mxu0 %v969
        %v1055 = vpop.f32.mrb[0].mxu0
        %v1056 = vadd.f32 0.0, %v1055
        %v1057 = vpop.f32.mrb[0].mxu0
        %v1058 = vpop.f32.mrb[0].mxu0
        %v1059 = vpop.f32.mrb[0].mxu0
        %1060 = vdwg.mxu0
        %v1061 = vadd.f32 %v951, %v1015
        %v1062 = vadd.f32 %v952, %v1017
        %v1063 = vadd.f32 %v953, %v1056
        %s1064 = scalar_lea.vmem %s1, 32
        %v1065 = vld [vmem:[%s1064] sm:$0xf]
        %1066 = vrot.lane.b32.xlu0 %v186, 90
        %v1067 = vpop.permute.xlu0 %1066
        %1068 = vrot.lane.b32.xlu0 %v194, 90
        %v1069 = vpop.permute.xlu0 %1068
        %1070 = vrot.lane.b32.xlu0 %v193, 90
        %v1071 = vpop.permute.xlu0 %1070
        %1072 = vrot.lane.b32.xlu0 %v295, 90
        %v1073 = vpop.permute.xlu0 %1072
        %vm1074 = vcmask 736256
        %v1075 = vsel %vm1074, %v1067, %v1069
        %v1076 = vsel %vm1074, %v1069, %v1071
        %v1077 = vsel %vm1074, %v1071, %v1073
        %v1079 = vsel %vm195, %v1065, 0
        %v1082 = vsel %vm199, %v1075, 0
        %v1085 = vsel %vm199, %v1076, 0
        %v1088 = vsel %vm199, %v1077, 0
        %1090 = vmatprep.subr.bf16.mxu0 %v1085
        %1091 = vmatpush1.bf16.msra.mxu0 %v1082
        %1092 = vmatprep.subr.bf16.mxu0 0
        %1093 = vmatpush1.bf16.msra.mxu0 0
        %1094 = vmatprep.subr.bf16.mxu0 0
        %1095 = vmatpush1.bf16.msra.mxu0 0
        %1096 = vmatprep.subr.bf16.mxu0 0
        %1097 = vmatpush1.bf16.msra.mxu0 0
        %1098 = vmatprep.subr.bf16.mxu0 0
        %1099 = vmatpush1.bf16.msra.mxu0 0
        %1100 = vmatprep.subr.bf16.mxu0 0
        %1101 = vmatpush1.bf16.msra.mxu0 0
        %1102 = vmatprep.subr.bf16.mxu0 0
        %1103 = vmatpush1.bf16.msra.mxu0 0
        %1104 = vmatprep.subr.bf16.mxu0 0
        %1105 = vmatpush1.bf16.msra.mxu0 0
        %1106 = vmatprep.subr.bf16.mxu0 0
        %1107 = vmatpush1.bf16.msra.mxu0 0
        %1108 = vmatprep.subr.bf16.mxu0 0
        %1109 = vmatpush1.bf16.msra.mxu0 0
        %1110 = vmatprep.subr.bf16.mxu0 0
        %1111 = vmatpush1.bf16.msra.mxu0 0
        %1112 = vmatprep.subr.bf16.mxu0 0
        %1113 = vmatpush1.bf16.msra.mxu0 0
        %1114 = vmatprep.subr.bf16.mxu0 0
        %1115 = vmatpush1.bf16.msra.mxu0 0
        %1116 = vmatprep.subr.bf16.mxu0 0
        %1117 = vmatpush1.bf16.msra.mxu0 0
        %1118 = vmatprep.subr.bf16.mxu0 0
        %1119 = vmatpush1.bf16.msra.mxu0 0
        %1120 = vmatprep.subr.bf16.mxu0 0
        %1121 = vmatpush1.bf16.msra.mxu0 0
        %1122 = vmatprep.mubr.bf16.mxu0 0
        %1123 = vmatmul.mubr.bf16.gmra.mrb[0].mxu0 %v1079
        %v1124 = vpop.f32.mrb[0].mxu0
        %v1125 = vadd.f32 0.0, %v1124
        %v1126 = vpop.f32.mrb[0].mxu0
        %v1127 = vadd.f32 0.0, %v1126
        %v1128 = vpop.f32.mrb[0].mxu0
        %v1129 = vpop.f32.mrb[0].mxu0
        %1130 = vdwg.mxu0
        %1131 = vmatprep.subr.bf16.mxu0 0
        %1132 = vmatpush1.bf16.msra.mxu0 %v1088
        %1133 = vmatprep.subr.bf16.mxu0 0
        %1134 = vmatpush1.bf16.msra.mxu0 0
        %1135 = vmatprep.subr.bf16.mxu0 0
        %1136 = vmatpush1.bf16.msra.mxu0 0
        %1137 = vmatprep.subr.bf16.mxu0 0
        %1138 = vmatpush1.bf16.msra.mxu0 0
        %1139 = vmatprep.subr.bf16.mxu0 0
        %1140 = vmatpush1.bf16.msra.mxu0 0
        %1141 = vmatprep.subr.bf16.mxu0 0
        %1142 = vmatpush1.bf16.msra.mxu0 0
        %1143 = vmatprep.subr.bf16.mxu0 0
        %1144 = vmatpush1.bf16.msra.mxu0 0
        %1145 = vmatprep.subr.bf16.mxu0 0
        %1146 = vmatpush1.bf16.msra.mxu0 0
        %1147 = vmatprep.subr.bf16.mxu0 0
        %1148 = vmatpush1.bf16.msra.mxu0 0
        %1149 = vmatprep.subr.bf16.mxu0 0
        %1150 = vmatpush1.bf16.msra.mxu0 0
        %1151 = vmatprep.subr.bf16.mxu0 0
        %1152 = vmatpush1.bf16.msra.mxu0 0
        %1153 = vmatprep.subr.bf16.mxu0 0
        %1154 = vmatpush1.bf16.msra.mxu0 0
        %1155 = vmatprep.subr.bf16.mxu0 0
        %1156 = vmatpush1.bf16.msra.mxu0 0
        %1157 = vmatprep.subr.bf16.mxu0 0
        %1158 = vmatpush1.bf16.msra.mxu0 0
        %1159 = vmatprep.subr.bf16.mxu0 0
        %1160 = vmatpush1.bf16.msra.mxu0 0
        %1161 = vmatprep.subr.bf16.mxu0 0
        %1162 = vmatpush1.bf16.msra.mxu0 0
        %1163 = vmatprep.mubr.bf16.mxu0 0
        %1164 = vmatmul.mubr.bf16.gmra.mrb[0].mxu0 %v1079
        %v1165 = vpop.f32.mrb[0].mxu0
        %v1166 = vadd.f32 0.0, %v1165
        %v1167 = vpop.f32.mrb[0].mxu0
        %v1168 = vpop.f32.mrb[0].mxu0
        %v1169 = vpop.f32.mrb[0].mxu0
        %1170 = vdwg.mxu0
        %v1171 = vadd.f32 %v1061, %v1125
        %v1172 = vadd.f32 %v1062, %v1127
        %v1173 = vadd.f32 %v1063, %v1166
        %v1174 = vmax.f32 %v1171, 0.0
        %v1175 = vmax.f32 %v1172, 0.0
        %v1176 = vmax.f32 %v1173, 0.0
        %1177 = vst [vmem:[%s163] sm:$0xff] %v1174
        %1178 = vst [vmem:[%s163 + $0x8] sm:$0xff] %v1175
        %1179 = vst [vmem:[%s163 + $0x10] sm:$0xff] %v1176
        %s1180 = sand.u32 %s93, 1
        %s1181 = scalar_lea.sflag [#allocation3], %s1180
        %s1182 = sand.u32 %s93, 1
        %s1183 = smul.addr %s1182, 24
        %s1184 = scalar_lea.vmem [#allocation2], %s1183
        // Predicated region
        $region33: #{tpu_custom_call.1} parent=31 // pred_check
          %p1185 = pneg %p103
        $region34: #{tpu_custom_call.1} parent=31 // pred_check_branch
          %1187 = sbr.rel (%p1185) target = $region36
        $region35: #{tpu_custom_call.1} parent=31 // pred_region
          %s1189 = ssub.s32 384, 384
          %1190 = vsyncadd %s1181, %s1189
          %s1191 = smul.addr %s17, 3
          %s1192 = smul.addr %s1191, 128
          %s1193 = scalar_lea.hbm %s3, %s1192
          %s1195 = sshll.u32 %s1184, 4
          %s1196 = int_to_ptr.vmem [resolvable:$true] %s1195
          %1198 = dma.vmem_to_hbm [thread:$0]  %s1196, 384, %s1193, %s1181
        $region36: #{tpu_custom_call.1} parent=31 // pred_fallthru
          _
      $region32: #{tpu_custom_call.1} parent=5 // pred_fallthru
        _
      %p1199 = scmp.le.s32.totalorder 2, %s12
      // Predicated region
      $region37: #{tpu_custom_call.1} parent=5 // pred_check
        %p1200 = pneg %p1199
      $region38: #{tpu_custom_call.1} parent=5 // pred_check_branch
        %1202 = sbr.rel (%p1200) target = $region40
      $region39: #{tpu_custom_call.1} parent=5 // pred_region
        %s1203 = ssub.s32 %s12, 2
        // Predicated region
        $region41: #{tpu_custom_call.1} parent=39 // pred_check
          %p1204 = pneg %p109
        $region42: #{tpu_custom_call.1} parent=39 // pred_check_branch
          %1206 = sbr.rel (%p1204) target = $region44
        $region43: #{tpu_custom_call.1} parent=39 // pred_region
          %s1207 = sand.u32 %s94, 1
          %s1208 = scalar_lea.sflag [#allocation3], %s1207
          %s1209 = sand.u32 %s94, 1
          %s1210 = smul.addr %s1209, 24
          %s1211 = scalar_lea.vmem [#allocation2], %s1210
          %1212 = dma.done %s1208, 384
        $region44: #{tpu_custom_call.1} parent=39 // pred_fallthru
          _
      $region40: #{tpu_custom_call.1} parent=5 // pred_fallthru
        _
    $region6: #{tpu_custom_call.1} parent=1 // loop_footer
      %s16 = sadd.s32 1, %s12
    $region7: #{tpu_custom_call.1} parent=1 // loop_footer_branch
      %11 = sbr.rel target = $region3
    $region8: #{tpu_custom_call.1} parent=1 // loop_exit
      _
    %1213 = vsyncpa [#allocation3], 1
    %s1214 = scalar_lea.sflag [#allocation3], 1
    %1215 = vsyncpa %s1214, 1

</llo_original>
